<compile_context>
chip_gen: v7x
topology: tpu7x:2x2x1
jax: 0.10.0
libtpu: 0.0.40
codegen_flags: <defaults>
</compile_context>

<pallas_src>
import functools

import jax
import jax.numpy as jnp
import numpy as np
from jax.experimental import pallas as pl
from jax.experimental.pallas import tpu as pltpu

EPS = 1e-5
_MISH_CAP = 20.0  # tanh(softplus(z)) == 1.0 in f32 beyond this


def _conv1d_gn_mish_kernel(x_ref, w_ref, p_ref, selr_ref, selb_ref,
                           rind_ref, bind_ref, o_ref, xs_ref, *,
                           c_in, length, ksize, inv_cnt, use_roll):
    """Fused Conv1d -> GroupNorm -> Mish on one (C_in, W) slab, W = NB * L."""
    pad = ksize // 2
    x = x_ref[...]
    x = x.reshape(x.shape[-2], x.shape[-1])            # (C_in, W); drop leading 1 if any
    lanes = x.shape[-1]

    # Lane position within each length-L batch segment (for the zero conv halo).
    pos = jax.lax.broadcasted_iota(jnp.int32, x.shape, 1) % length

    # ---- K tap-shifted views written straight into the VMEM scratch -------------
    for k in range(ksize):                              # K is small & static
        d = k - pad
        if d == 0:
            tap = x
        else:
            if use_roll:
                # roll so that tap[:, l] = x[:, (l + d) % W]  (XLU, off the VALU path)
                shifted = pltpu.roll(x, shift=(-d) % lanes, axis=1)
            else:
                # two-slice roll emulation for non-128-multiple lane widths
                shifted = jnp.concatenate([x[:, d:], x[:, :d]], axis=1)
            valid = (pos < length - d) if d > 0 else (pos >= -d)
            tap = jnp.where(valid, shifted, jnp.zeros_like(shifted))
        xs_ref[k * c_in:(k + 1) * c_in, :] = tap

    # ---- Conv1d as ONE MXU matmul; operands stay in the input dtype -------------
    y = jnp.dot(w_ref[...], xs_ref[...],
                preferred_element_type=jnp.float32)     # (C_out, W) f32

    p = p_ref[...].astype(jnp.float32)                  # (C_out, 3) = [bias, gamma, beta]
    b, gamma, beta = p[:, 0:1], p[:, 1:2], p[:, 2:3]
    sel_r = selr_ref[...]                               # (W, NB)  lane -> batch reduce
    sel_b = selb_ref[...]                               # (NB, W)  batch -> lane broadcast
    rind = rind_ref[...]                                # (G, C_out) channel -> group reduce
    bind = bind_ref[...]                                # (C_out, G) group -> channel broadcast

    # ---- GroupNorm, segmented per folded batch element ---------------------------
    # per-(channel, batch) sums of conv(+bias); bias adds L*b per channel
    s1 = jnp.dot(y, sel_r, preferred_element_type=jnp.float32) + b * float(length)
    mean_g = jnp.dot(rind, s1, preferred_element_type=jnp.float32) * inv_cnt   # (G, NB)
    mean_cb = jnp.dot(bind, mean_g, preferred_element_type=jnp.float32)        # (C_out, NB)
    mean = jnp.dot(mean_cb, sel_b, preferred_element_type=jnp.float32)         # (C_out, W)

    d0 = y + (b - mean)                                 # centered conv + bias
    s2 = jnp.dot(d0 * d0, sel_r, preferred_element_type=jnp.float32)           # two-pass var
    var_g = jnp.dot(rind, s2, preferred_element_type=jnp.float32) * inv_cnt    # (G, NB)
    scale_cb = jnp.dot(bind, jax.lax.rsqrt(var_g + EPS),
                       preferred_element_type=jnp.float32) * gamma             # (C_out, NB)
    scale = jnp.dot(scale_cb, sel_b, preferred_element_type=jnp.float32)       # (C_out, W)

    z = d0 * scale + beta

    # ---- Mish with a single exp: tanh(softplus(z)) = u(u+2)/(u(u+2)+2) ----------
    u = jnp.exp(jnp.minimum(z, _MISH_CAP))
    t = u * (u + 2.0)
    mish = z * (t * pl.reciprocal(t + 2.0, approx=False))
    mish = jnp.where(z > _MISH_CAP, z, mish)

    o_ref[...] = mish.reshape(o_ref.shape).astype(o_ref.dtype)   # single dense store


def _pick_batch_fold(n, length):
    """Batch elements folded into the lane dim of one grid step (lane width nb*L)."""
    if length >= 256:
        return 1                      # already lane-dense; keep per-batch grid
    best, best_w = 1, length
    for nb in range(2, n + 1):
        if n % nb:
            continue
        w = nb * length
        if w > 1024:                  # bound per-step VMEM residency
            break
        if not (w % 128 == 0 or nb == n):
            continue                  # keep the Pallas lane-block width legal
        if best_w >= 256:
            break                     # dense enough; keep grid steps for megacore
        best, best_w = nb, w
    return best


def _vmem_limit_bytes():
    """Per-generation scoped-VMEM budget: v5e/v6e have 128 MiB, v7x only 64 MiB/TC."""
    try:
        kind = jax.devices()[0].device_kind.lower()
    except Exception:
        kind = ""
    if "v5" in kind or "v6" in kind:
        return 100 * 1024 * 1024
    return 48 * 1024 * 1024           # conservative default (v7x headroom)


def conv1d_block(x, weight, bias, gamma, beta, *, n_groups):
    """x: (N, C_in, L); weight: (C_out, C_in, K); bias/gamma/beta: (C_out,)."""
    n, c_in, length = x.shape
    c_out, _, ksize = weight.shape
    assert ksize % 2 == 1, "padding = K // 2 preserves L only for odd K"
    assert c_out % n_groups == 0
    cg = c_out // n_groups

    # weight (C_out, C_in, K) -> (C_out, K*C_in); row order matches the k-major,
    # c-minor tap stacking written into the scratch inside the kernel.
    w2 = jnp.transpose(weight, (0, 2, 1)).reshape(c_out, ksize * c_in)
    params = jnp.stack([bias.astype(jnp.float32),
                        gamma.astype(jnp.float32),
                        beta.astype(jnp.float32)], axis=1)            # (C_out, 3)

    nb = _pick_batch_fold(n, length)
    lanes = nb * length
    inv_cnt = 1.0 / float(cg * length)
    use_roll = (lanes % 128 == 0)

    # lane<->batch selectors (tiny, exact 0/1) and group indicators
    lane_batch = jnp.arange(lanes) // length
    sel_r = (lane_batch[:, None] == jnp.arange(nb)[None, :]).astype(jnp.float32)   # (W, NB)
    sel_b = jnp.transpose(sel_r)                                                    # (NB, W)
    gid = jnp.arange(c_out) // cg
    rind = (jnp.arange(n_groups)[:, None] == gid[None, :]).astype(jnp.float32)     # (G, C_out)
    bind = jnp.transpose(rind)                                                      # (C_out, G)

    kernel = functools.partial(
        _conv1d_gn_mish_kernel,
        c_in=c_in, length=length, ksize=ksize, inv_cnt=inv_cnt, use_roll=use_roll)

    common_specs = [
        pl.BlockSpec((c_out, ksize * c_in), lambda i: (0, 0)),
        pl.BlockSpec((c_out, 3), lambda i: (0, 0)),
        pl.BlockSpec((lanes, nb), lambda i: (0, 0)),
        pl.BlockSpec((nb, lanes), lambda i: (0, 0)),
        pl.BlockSpec((n_groups, c_out), lambda i: (0, 0)),
        pl.BlockSpec((c_out, n_groups), lambda i: (0, 0)),
    ]
    scratch = [pltpu.VMEM((ksize * c_in, lanes), x.dtype)]
    cparams = pltpu.CompilerParams(
        dimension_semantics=("parallel",),
        vmem_limit_bytes=_vmem_limit_bytes())

    if nb > 1:
        # Lane-dense path: x presented as (C_in, N*L); layout plumbing done in XLA.
        n_blocks = n // nb
        x_t = jnp.transpose(x, (1, 0, 2)).reshape(c_in, n * length)
        out_t = pl.pallas_call(
            kernel,
            out_shape=jax.ShapeDtypeStruct((c_out, n * length), x.dtype),
            grid_spec=pltpu.PrefetchScalarGridSpec(
                num_scalar_prefetch=0,
                grid=(n_blocks,),
                in_specs=[pl.BlockSpec((c_in, lanes), lambda i: (0, i))] + common_specs,
                out_specs=pl.BlockSpec((c_out, lanes), lambda i: (0, i)),
                scratch_shapes=scratch),
            compiler_params=cparams,
        )(x_t, w2, params, sel_r, sel_b, rind, bind)
        return jnp.transpose(out_t.reshape(c_out, n, length), (1, 0, 2))

    # Per-batch path (L already lane-dense or N == 1): no layout plumbing needed.
    return pl.pallas_call(
        kernel,
        out_shape=jax.ShapeDtypeStruct((n, c_out, length), x.dtype),
        grid_spec=pltpu.PrefetchScalarGridSpec(
            num_scalar_prefetch=0,
            grid=(n,),
            in_specs=[pl.BlockSpec((1, c_in, length), lambda b: (b, 0, 0))] + common_specs,
            out_specs=pl.BlockSpec((1, c_out, length), lambda b: (b, 0, 0)),
            scratch_shapes=scratch),
        compiler_params=cparams,
    )(x, w2, params, sel_r, sel_b, rind, bind)


def _reference(x, weight, bias, gamma, beta, *, n_groups):
    """Pure-JAX reference mirroring torch Conv1d -> GroupNorm -> Mish."""
    n, c_in, length = x.shape
    c_out, _, ksize = weight.shape
    pad = ksize // 2
    y = jax.lax.conv_general_dilated(
        x, weight, window_strides=(1,), padding=[(pad, pad)],
        dimension_numbers=("NCH", "OIH", "NCH"))
    y = y + bias.reshape(1, c_out, 1)
    cg = c_out // n_groups
    yg = y.reshape(n, n_groups, cg, length)
    mean = jnp.mean(yg, axis=(2, 3), keepdims=True)
    var = jnp.mean((yg - mean) ** 2, axis=(2, 3), keepdims=True)
    yn = ((yg - mean) / jnp.sqrt(var + EPS)).reshape(n, c_out, length)
    yn = yn * gamma.reshape(1, c_out, 1) + beta.reshape(1, c_out, 1)
    return yn * jnp.tanh(jax.nn.softplus(yn))


if __name__ == "__main__":
    # (N, C_in, C_out, L, K, G) — exercise the folded/roll, folded/slice,
    # per-batch, and multi-grid-step paths at small shapes.
    configs = [
        (2, 8, 16, 64, 3, 8),    # folded, W=128, pltpu.roll path, 1 grid step
        (2, 8, 16, 32, 5, 4),    # folded, W=64, slice-shift path, K=5
        (1, 8, 16, 32, 3, 8),    # per-batch 3-D path (NB=1)
        (16, 8, 16, 32, 3, 8),   # folded, W=256, 2 parallel grid steps
    ]
    key = jax.random.PRNGKey(0)
    for (N, C_IN, C_OUT, L, K, G) in configs:
        key, k_x, k_w, k_b, k_g, k_be = jax.random.split(key, 6)
        x = jax.random.normal(k_x, (N, C_IN, L), dtype=jnp.float32)
        weight = 0.1 * jax.random.normal(k_w, (C_OUT, C_IN, K), dtype=jnp.float32)
        bias = 0.1 * jax.random.normal(k_b, (C_OUT,), dtype=jnp.float32)
        gamma = 1.0 + 0.1 * jax.random.normal(k_g, (C_OUT,), dtype=jnp.float32)
        beta = 0.1 * jax.random.normal(k_be, (C_OUT,), dtype=jnp.float32)

        out = conv1d_block(x, weight, bias, gamma, beta, n_groups=G)
        out = jax.block_until_ready(out)

        ref = _reference(x, weight, bias, gamma, beta, n_groups=G)
        np.testing.assert_allclose(np.asarray(out), np.asarray(ref),
                                   rtol=1e-4, atol=1e-4)
    print("KERNEL_OK")
</pallas_src>

<mosaic_0001>
module attributes {stable_mosaic.version = 11 : i64} {
  func.func @_conv1d_gn_mish_kernel(%arg0: i32, %arg1: memref<8x128xf32, #tpu.memory_space<vmem>>, %arg2: memref<16x24xf32, #tpu.memory_space<vmem>>, %arg3: memref<16x3xf32, #tpu.memory_space<vmem>>, %arg4: memref<128x2xf32, #tpu.memory_space<vmem>>, %arg5: memref<2x128xf32, #tpu.memory_space<vmem>>, %arg6: memref<8x16xf32, #tpu.memory_space<vmem>>, %arg7: memref<16x8xf32, #tpu.memory_space<vmem>>, %arg8: memref<16x128xf32, #tpu.memory_space<vmem>>, %arg9: memref<24x128xf32, #tpu.memory_space<vmem>>) attributes {dimension_semantics = [#tpu.dimension_semantics<parallel>], iteration_bounds = array<i64: 1>, scalar_prefetch = 0 : i64, scratch_operands = 1 : i64, tpu.core_type = #tpu.core_type<tc>, window_params = [{transform_indices = @transform_0, window_bounds = array<i64: 8, 128>}, {pipeline_mode = #tpu.pipeline_mode<synchronous>, transform_indices = @transform_1, window_bounds = array<i64: 16, 24>}, {pipeline_mode = #tpu.pipeline_mode<synchronous>, transform_indices = @transform_2, window_bounds = array<i64: 16, 3>}, {pipeline_mode = #tpu.pipeline_mode<synchronous>, transform_indices = @transform_3, window_bounds = array<i64: 128, 2>}, {pipeline_mode = #tpu.pipeline_mode<synchronous>, transform_indices = @transform_4, window_bounds = array<i64: 2, 128>}, {pipeline_mode = #tpu.pipeline_mode<synchronous>, transform_indices = @transform_5, window_bounds = array<i64: 8, 16>}, {pipeline_mode = #tpu.pipeline_mode<synchronous>, transform_indices = @transform_6, window_bounds = array<i64: 16, 8>}, {transform_indices = @transform_7, window_bounds = array<i64: 16, 128>}]} {
    %c0 = arith.constant 0 : index
    %c0_0 = arith.constant 0 : index
    %0 = vector.load %arg1[%c0, %c0_0] : memref<8x128xf32, #tpu.memory_space<vmem>>, vector<8x128xf32>
    %1 = tpu.iota {dimensions = array<i32: 1>} : vector<8x128xi32>
    %c64_i32 = arith.constant 64 : i32
    %c0_i32 = arith.constant 0 : i32
    %2 = arith.cmpi eq, %c64_i32, %c0_i32 : i32
    %c1_i32 = arith.constant 1 : i32
    %3 = arith.select %2, %c1_i32, %c64_i32 : i32
    %4 = vector.broadcast %3 : i32 to vector<8x128xi32>
    %5 = arith.remsi %1, %4 : vector<8x128xi32>
    %c0_i32_1 = arith.constant 0 : i32
    %6 = vector.broadcast %c0_i32_1 : i32 to vector<8x128xi32>
    %7 = arith.cmpi ne, %5, %6 : vector<8x128xi32>
    %c0_i32_2 = arith.constant 0 : i32
    %8 = vector.broadcast %c0_i32_2 : i32 to vector<8x128xi32>
    %9 = arith.cmpi slt, %5, %8 : vector<8x128xi32>
    %c0_i32_3 = arith.constant 0 : i32
    %10 = arith.cmpi slt, %3, %c0_i32_3 : i32
    %11 = vector.broadcast %10 : i1 to vector<8x128xi1>
    %12 = vector.broadcast %11 : vector<8x128xi1> to vector<8x128xi1>
    %13 = arith.xori %9, %12 : vector<8x128xi1>
    %14 = arith.andi %13, %7 : vector<8x128xi1>
    %15 = vector.broadcast %3 : i32 to vector<8x128xi32>
    %16 = arith.addi %5, %15 : vector<8x128xi32>
    %17 = arith.select %14, %16, %5 : vector<8x128xi1>, vector<8x128xi32>
    %c1_i32_4 = arith.constant 1 : i32
    %18 = tpu.dynamic_rotate %0 by %c1_i32_4 dim 1 : vector<8x128xf32>, i32 -> vector<8x128xf32>
    %c1_i32_5 = arith.constant 1 : i32
    %19 = vector.broadcast %c1_i32_5 : i32 to vector<8x128xi32>
    %20 = arith.cmpi sge, %17, %19 : vector<8x128xi32>
    %cst = arith.constant 0.000000e+00 : f32
    %21 = vector.broadcast %cst : f32 to vector<8x128xf32>
    %22 = arith.select %20, %18, %21 : vector<8x128xi1>, vector<8x128xf32>
    %c0_6 = arith.constant 0 : index
    %c0_7 = arith.constant 0 : index
    %23 = vector.load %arg9[%c0_6, %c0_7] : memref<24x128xf32, #tpu.memory_space<vmem>>, vector<8x128xf32>
    tpu.vector_store %arg9[%c0_6, %c0_7], %22 {strides = array<i32>} : memref<24x128xf32, #tpu.memory_space<vmem>>, vector<8x128xf32>,
    %c8 = arith.constant 8 : index
    %c0_8 = arith.constant 0 : index
    %24 = vector.load %arg9[%c8, %c0_8] : memref<24x128xf32, #tpu.memory_space<vmem>>, vector<8x128xf32>
    tpu.vector_store %arg9[%c8, %c0_8], %0 {strides = array<i32>} : memref<24x128xf32, #tpu.memory_space<vmem>>, vector<8x128xf32>,
    %c127_i32 = arith.constant 127 : i32
    %25 = tpu.dynamic_rotate %0 by %c127_i32 dim 1 : vector<8x128xf32>, i32 -> vector<8x128xf32>
    %c63_i32 = arith.constant 63 : i32
    %26 = vector.broadcast %c63_i32 : i32 to vector<8x128xi32>
    %27 = arith.cmpi slt, %17, %26 : vector<8x128xi32>
    %cst_9 = arith.constant 0.000000e+00 : f32
    %28 = vector.broadcast %cst_9 : f32 to vector<8x128xf32>
    %29 = arith.select %27, %25, %28 : vector<8x128xi1>, vector<8x128xf32>
    %c16 = arith.constant 16 : index
    %c0_10 = arith.constant 0 : index
    %30 = vector.load %arg9[%c16, %c0_10] : memref<24x128xf32, #tpu.memory_space<vmem>>, vector<8x128xf32>
    tpu.vector_store %arg9[%c16, %c0_10], %29 {strides = array<i32>} : memref<24x128xf32, #tpu.memory_space<vmem>>, vector<8x128xf32>,
    %c0_11 = arith.constant 0 : index
    %c0_12 = arith.constant 0 : index
    %31 = vector.load %arg2[%c0_11, %c0_12] : memref<16x24xf32, #tpu.memory_space<vmem>>, vector<16x24xf32>
    %c0_13 = arith.constant 0 : index
    %c0_14 = arith.constant 0 : index
    %32 = vector.load %arg9[%c0_13, %c0_14] : memref<24x128xf32, #tpu.memory_space<vmem>>, vector<24x128xf32>
    %cst_15 = arith.constant dense<0.000000e+00> : vector<16x128xf32>
    %33 = tpu.matmul %31, %32, %cst_15 {dimension_numbers = #tpu.dot_dimension_numbers<[1], [0], [0], [1], [0, 0, 1, 1], [], []>} : vector<16x24xf32>, vector<24x128xf32>, vector<16x128xf32> -> vector<16x128xf32>
    %c0_16 = arith.constant 0 : index
    %c0_17 = arith.constant 0 : index
    %34 = vector.load %arg3[%c0_16, %c0_17] : memref<16x3xf32, #tpu.memory_space<vmem>>, vector<16x3xf32>
    %35 = vector.extract_strided_slice %34 {offsets = [0, 0], sizes = [16, 1], strides = [1, 1]} : vector<16x3xf32> to vector<16x1xf32>
    %36 = vector.extract_strided_slice %34 {offsets = [0, 1], sizes = [16, 1], strides = [1, 1]} : vector<16x3xf32> to vector<16x1xf32>
    %37 = vector.extract_strided_slice %34 {offsets = [0, 2], sizes = [16, 1], strides = [1, 1]} : vector<16x3xf32> to vector<16x1xf32>
    %c0_18 = arith.constant 0 : index
    %c0_19 = arith.constant 0 : index
    %38 = vector.load %arg4[%c0_18, %c0_19] : memref<128x2xf32, #tpu.memory_space<vmem>>, vector<128x2xf32>
    %c0_20 = arith.constant 0 : index
    %c0_21 = arith.constant 0 : index
    %39 = vector.load %arg5[%c0_20, %c0_21] : memref<2x128xf32, #tpu.memory_space<vmem>>, vector<2x128xf32>
    %c0_22 = arith.constant 0 : index
    %c0_23 = arith.constant 0 : index
    %40 = vector.load %arg6[%c0_22, %c0_23] : memref<8x16xf32, #tpu.memory_space<vmem>>, vector<8x16xf32>
    %c0_24 = arith.constant 0 : index
    %c0_25 = arith.constant 0 : index
    %41 = vector.load %arg7[%c0_24, %c0_25] : memref<16x8xf32, #tpu.memory_space<vmem>>, vector<16x8xf32>
    %cst_26 = arith.constant dense<0.000000e+00> : vector<16x2xf32>
    %42 = tpu.matmul %33, %38, %cst_26 {dimension_numbers = #tpu.dot_dimension_numbers<[1], [0], [0], [1], [0, 0, 1, 1], [], []>} : vector<16x128xf32>, vector<128x2xf32>, vector<16x2xf32> -> vector<16x2xf32>
    %cst_27 = arith.constant 6.400000e+01 : f32
    %43 = vector.broadcast %cst_27 : f32 to vector<16x1xf32>
    %44 = arith.mulf %35, %43 : vector<16x1xf32>
    %45 = vector.broadcast %44 : vector<16x1xf32> to vector<16x2xf32>
    %46 = arith.addf %42, %45 : vector<16x2xf32>
    %cst_28 = arith.constant dense<0.000000e+00> : vector<8x2xf32>
    %47 = tpu.matmul %40, %46, %cst_28 {dimension_numbers = #tpu.dot_dimension_numbers<[1], [0], [0], [1], [0, 0, 1, 1], [], []>} : vector<8x16xf32>, vector<16x2xf32>, vector<8x2xf32> -> vector<8x2xf32>
    %cst_29 = arith.constant 7.812500e-03 : f32
    %48 = vector.broadcast %cst_29 : f32 to vector<8x2xf32>
    %49 = arith.mulf %47, %48 : vector<8x2xf32>
    %cst_30 = arith.constant dense<0.000000e+00> : vector<16x2xf32>
    %50 = tpu.matmul %41, %49, %cst_30 {dimension_numbers = #tpu.dot_dimension_numbers<[1], [0], [0], [1], [0, 0, 1, 1], [], []>} : vector<16x8xf32>, vector<8x2xf32>, vector<16x2xf32> -> vector<16x2xf32>
    %cst_31 = arith.constant dense<0.000000e+00> : vector<16x128xf32>
    %51 = tpu.matmul %50, %39, %cst_31 {dimension_numbers = #tpu.dot_dimension_numbers<[1], [0], [0], [1], [0, 0, 1, 1], [], []>} : vector<16x2xf32>, vector<2x128xf32>, vector<16x128xf32> -> vector<16x128xf32>
    %52 = vector.broadcast %35 : vector<16x1xf32> to vector<16x128xf32>
    %53 = arith.subf %52, %51 : vector<16x128xf32>
    %54 = arith.addf %33, %53 : vector<16x128xf32>
    %55 = arith.mulf %54, %54 : vector<16x128xf32>
    %cst_32 = arith.constant dense<0.000000e+00> : vector<16x2xf32>
    %56 = tpu.matmul %55, %38, %cst_32 {dimension_numbers = #tpu.dot_dimension_numbers<[1], [0], [0], [1], [0, 0, 1, 1], [], []>} : vector<16x128xf32>, vector<128x2xf32>, vector<16x2xf32> -> vector<16x2xf32>
    %cst_33 = arith.constant dense<0.000000e+00> : vector<8x2xf32>
    %57 = tpu.matmul %40, %56, %cst_33 {dimension_numbers = #tpu.dot_dimension_numbers<[1], [0], [0], [1], [0, 0, 1, 1], [], []>} : vector<8x16xf32>, vector<16x2xf32>, vector<8x2xf32> -> vector<8x2xf32>
    %cst_34 = arith.constant 7.812500e-03 : f32
    %58 = vector.broadcast %cst_34 : f32 to vector<8x2xf32>
    %59 = arith.mulf %57, %58 : vector<8x2xf32>
    %cst_35 = arith.constant 9.99999974E-6 : f32
    %60 = vector.broadcast %cst_35 : f32 to vector<8x2xf32>
    %61 = arith.addf %59, %60 : vector<8x2xf32>
    %62 = math.rsqrt %61 : vector<8x2xf32>
    %cst_36 = arith.constant dense<0.000000e+00> : vector<16x2xf32>
    %63 = tpu.matmul %41, %62, %cst_36 {dimension_numbers = #tpu.dot_dimension_numbers<[1], [0], [0], [1], [0, 0, 1, 1], [], []>} : vector<16x8xf32>, vector<8x2xf32>, vector<16x2xf32> -> vector<16x2xf32>
    %64 = vector.broadcast %36 : vector<16x1xf32> to vector<16x2xf32>
    %65 = arith.mulf %63, %64 : vector<16x2xf32>
    %cst_37 = arith.constant dense<0.000000e+00> : vector<16x128xf32>
    %66 = tpu.matmul %65, %39, %cst_37 {dimension_numbers = #tpu.dot_dimension_numbers<[1], [0], [0], [1], [0, 0, 1, 1], [], []>} : vector<16x2xf32>, vector<2x128xf32>, vector<16x128xf32> -> vector<16x128xf32>
    %67 = arith.mulf %54, %66 : vector<16x128xf32>
    %68 = vector.broadcast %37 : vector<16x1xf32> to vector<16x128xf32>
    %69 = arith.addf %67, %68 : vector<16x128xf32>
    %cst_38 = arith.constant 2.000000e+01 : f32
    %70 = vector.broadcast %cst_38 : f32 to vector<16x128xf32>
    %71 = arith.minimumf %69, %70 : vector<16x128xf32>
    %72 = math.exp %71 : vector<16x128xf32>
    %cst_39 = arith.constant 2.000000e+00 : f32
    %73 = vector.broadcast %cst_39 : f32 to vector<16x128xf32>
    %74 = arith.addf %72, %73 : vector<16x128xf32>
    %75 = arith.mulf %72, %74 : vector<16x128xf32>
    %cst_40 = arith.constant 2.000000e+00 : f32
    %76 = vector.broadcast %cst_40 : f32 to vector<16x128xf32>
    %77 = arith.addf %75, %76 : vector<16x128xf32>
    %78 = tpu.reciprocal %77 : vector<16x128xf32> -> vector<16x128xf32>
    %79 = arith.mulf %75, %78 : vector<16x128xf32>
    %80 = arith.mulf %69, %79 : vector<16x128xf32>
    %cst_41 = arith.constant 2.000000e+01 : f32
    %81 = vector.broadcast %cst_41 : f32 to vector<16x128xf32>
    %82 = arith.cmpf ogt, %69, %81 : vector<16x128xf32>
    %83 = arith.select %82, %69, %80 : vector<16x128xi1>, vector<16x128xf32>
    %c0_42 = arith.constant 0 : index
    %c0_43 = arith.constant 0 : index
    %84 = vector.load %arg8[%c0_42, %c0_43] : memref<16x128xf32, #tpu.memory_space<vmem>>, vector<16x128xf32>
    tpu.vector_store %arg8[%c0_42, %c0_43], %83 {strides = array<i32>} : memref<16x128xf32, #tpu.memory_space<vmem>>, vector<16x128xf32>,
    return
  }
  func.func @transform_0(%arg0: i32) -> (i32, i32) {
    %c0_i32 = arith.constant 0 : i32
    %c0_i32_0 = arith.constant 0 : i32
    return %c0_i32, %arg0 : i32, i32
  }
  func.func @transform_1(%arg0: i32) -> (i32, i32) {
    %c0_i32 = arith.constant 0 : i32
    %c0_i32_0 = arith.constant 0 : i32
    %c0_i32_1 = arith.constant 0 : i32
    return %c0_i32, %c0_i32_0 : i32, i32
  }
  func.func @transform_2(%arg0: i32) -> (i32, i32) {
    %c0_i32 = arith.constant 0 : i32
    %c0_i32_0 = arith.constant 0 : i32
    %c0_i32_1 = arith.constant 0 : i32
    return %c0_i32, %c0_i32_0 : i32, i32
  }
  func.func @transform_3(%arg0: i32) -> (i32, i32) {
    %c0_i32 = arith.constant 0 : i32
    %c0_i32_0 = arith.constant 0 : i32
    %c0_i32_1 = arith.constant 0 : i32
    return %c0_i32, %c0_i32_0 : i32, i32
  }
  func.func @transform_4(%arg0: i32) -> (i32, i32) {
    %c0_i32 = arith.constant 0 : i32
    %c0_i32_0 = arith.constant 0 : i32
    %c0_i32_1 = arith.constant 0 : i32
    return %c0_i32, %c0_i32_0 : i32, i32
  }
  func.func @transform_5(%arg0: i32) -> (i32, i32) {
    %c0_i32 = arith.constant 0 : i32
    %c0_i32_0 = arith.constant 0 : i32
    %c0_i32_1 = arith.constant 0 : i32
    return %c0_i32, %c0_i32_0 : i32, i32
  }
  func.func @transform_6(%arg0: i32) -> (i32, i32) {
    %c0_i32 = arith.constant 0 : i32
    %c0_i32_0 = arith.constant 0 : i32
    %c0_i32_1 = arith.constant 0 : i32
    return %c0_i32, %c0_i32_0 : i32, i32
  }
  func.func @transform_7(%arg0: i32) -> (i32, i32) {
    %c0_i32 = arith.constant 0 : i32
    %c0_i32_0 = arith.constant 0 : i32
    return %c0_i32, %arg0 : i32, i32
  }
}

</mosaic_0001>

<llo_original>
// kernel: tpu_custom_call.1
$region0: #{tpu_custom_call.1}
  #allocation0 [shape = 'u32[]', space=smem, size = 0x4, offset = 0x4, fixed_abs, tag = 'smem constant byte address 0x4 - core index']
  #allocation1 [shape = 'u32[144,128]{1,0:T(1,128)}', space=vmem, size = 0x12000, scoped, tag = 'internal scratch']
  #allocation2 [shape = 'f32[24,128]{1,0:T(8,128)}', space=vmem, size = 0x3000, scoped, tag = 'scratch operand']
  %s0 = inlined_call_operand.vmem [shape: f32[8,128], index: 0, kind: input, shape index: {}]
  %s1 = inlined_call_operand.vmem [shape: f32[16,24], index: 1, kind: input, shape index: {}]
  %s2 = inlined_call_operand.vmem [shape: f32[16,3], index: 2, kind: input, shape index: {}]
  %s3 = inlined_call_operand.vmem [shape: f32[128,2], index: 3, kind: input, shape index: {}]
  %s4 = inlined_call_operand.vmem [shape: f32[2,128], index: 4, kind: input, shape index: {}]
  %s5 = inlined_call_operand.vmem [shape: f32[8,16], index: 5, kind: input, shape index: {}]
  %s6 = inlined_call_operand.vmem [shape: f32[16,8], index: 6, kind: input, shape index: {}]
  %s7 = inlined_call_operand.hbm [shape: f32[16,128], index: 7, kind: output, shape index: {}]
  %s8 = sld [smem:[#allocation0]]
  $region38: #{tpu_custom_call.1} parent=0
    _
  %s10 = ssub.s32 1, %s8
  %s11 = scalar_select 0, %s10, %s8
  $region1: #{tpu_custom_call.1} parent=0
    #allocation3 [shape = 'u8[8192]{0}', space=vmem, size = 0x2000, scoped, tag = 'output window, operand 0, single buffered']
    #allocation4 [shape = 's32[1]{0}', space=sflag, size = 0x4, scoped, tag = 'scoped memory for tpu_custom_call.1']
    %12 = vsyncpa [#allocation4], 0
    // Predicated region
    $region2: #{tpu_custom_call.1} parent=1 // pred_check
      _
    $region3: #{tpu_custom_call.1} parent=1 // pred_check_branch
      %14 = sbr.rel (0) target = $region5
    $region4: #{tpu_custom_call.1} parent=1 // pred_region
      _
    $region5: #{tpu_custom_call.1} parent=1 // pred_fallthru
      _
    // Predicated region
    $region6: #{tpu_custom_call.1} parent=1 // pred_check
      _
    $region7: #{tpu_custom_call.1} parent=1 // pred_check_branch
      %16 = sbr.rel (0) target = $region9
    $region8: #{tpu_custom_call.1} parent=1 // pred_region
      _
    $region9: #{tpu_custom_call.1} parent=1 // pred_fallthru
      _
    // Predicated region
    $region10: #{tpu_custom_call.1} parent=1 // pred_check
      _
    $region11: #{tpu_custom_call.1} parent=1 // pred_check_branch
      %18 = sbr.rel (0) target = $region13
    $region12: #{tpu_custom_call.1} parent=1 // pred_region
      _
    $region13: #{tpu_custom_call.1} parent=1 // pred_fallthru
      _
    // Predicated region
    $region14: #{tpu_custom_call.1} parent=1 // pred_check
      _
    $region15: #{tpu_custom_call.1} parent=1 // pred_check_branch
      %20 = sbr.rel (0) target = $region17
    $region16: #{tpu_custom_call.1} parent=1 // pred_region
      _
    $region17: #{tpu_custom_call.1} parent=1 // pred_fallthru
      _
    // Predicated region
    $region18: #{tpu_custom_call.1} parent=1 // pred_check
      _
    $region19: #{tpu_custom_call.1} parent=1 // pred_check_branch
      %22 = sbr.rel (0) target = $region21
    $region20: #{tpu_custom_call.1} parent=1 // pred_region
      _
    $region21: #{tpu_custom_call.1} parent=1 // pred_fallthru
      _
    // Predicated region
    $region22: #{tpu_custom_call.1} parent=1 // pred_check
      _
    $region23: #{tpu_custom_call.1} parent=1 // pred_check_branch
      %24 = sbr.rel (0) target = $region25
    $region24: #{tpu_custom_call.1} parent=1 // pred_region
      _
    $region25: #{tpu_custom_call.1} parent=1 // pred_fallthru
      _
    // Predicated region
    $region26: #{tpu_custom_call.1} parent=1 // pred_check
      _
    $region27: #{tpu_custom_call.1} parent=1 // pred_check_branch
      %26 = sbr.rel (0) target = $region29
    $region28: #{tpu_custom_call.1} parent=1 // pred_region
      _
    $region29: #{tpu_custom_call.1} parent=1 // pred_fallthru
      _
    %v27 = vld [vmem:[%s0] sm:$0xff]
    %v28 = vlaneseq
    %v29 = vand.u32 %v28, 127
    %vm30 = vcmp.lt.s32.totalorder %v29, 0
    %v31 = vsub.s32 0, %v29
    %v32 = vsel %vm30, %v31, %v29
    %v33 = vshrl.u32 %v32, 6
    %v34 = vand.u32 %v32, 63
    %v35 = vsub.s32 0, %v34
    %v36 = vsel %vm30, %v35, %v34
    %vm37 = vcmp.ne.s32.totalorder %v36, 0
    %vm38 = vcmp.lt.s32.totalorder %v36, 0
    %vm39 = vmand %vm38, %vm37
    %v40 = vadd.s32 %v36, 64
    %v41 = vsel %vm39, %v40, %v36
    %42 = vrot.lane.b32.xlu0 %v27, 1
    %v43 = vpop.permute.xlu0 %42
    %vm44 = vcmp.ge.s32.totalorder %v41, 1
    %v45 = vsel %vm44, %v43, 0.0
    %46 = vst [vmem:[#allocation2] sm:$0xff] %v45
    %47 = vst [vmem:[#allocation2 + $0x8] sm:$0xff] %v27
    %48 = vrot.lane.b32.xlu0 %v27, 127
    %v49 = vpop.permute.xlu0 %48
    %vm50 = vcmp.lt.s32.totalorder %v41, 63
    %v51 = vsel %vm50, %v49, 0.0
    %52 = vst [vmem:[#allocation2 + $0x10] sm:$0xff] %v51
    %v53 = vld [vmem:[%s1] sm:$0xff]
    %v54 = vld [vmem:[%s1 + $0x8] sm:$0xff]
    %v55 = vld [vmem:[#allocation2] sm:$0xff]
    %v56 = vld [vmem:[#allocation2 + $0x8] sm:$0xff]
    %v57 = vld [vmem:[#allocation2 + $0x10] sm:$0xff]
    %vm58 = vcmask 195584
    %v60 = vsel %vm58, %v53, 0
    %v63 = vsel %vm58, %v54, 0
    %65 = vmatprep.subr.mxu0 0.0
    %66 = vmatpush1.msra.mxu0 %v55
    %67 = vmatprep.subr.mxu0 0.0
    %68 = vmatpush1.msra.mxu0 %v56
    %69 = vmatprep.subr.mxu0 0.0
    %70 = vmatpush1.msra.mxu0 %v57
    %71 = vmatprep.subr.mxu0 0.0
    %72 = vmatpush1.msra.mxu0 0.0
    %73 = vmatprep.subr.mxu0 0.0
    %74 = vmatpush1.msra.mxu0 0.0
    %75 = vmatprep.subr.mxu0 0.0
    %76 = vmatpush1.msra.mxu0 0.0
    %77 = vmatprep.subr.mxu0 0.0
    %78 = vmatpush1.msra.mxu0 0.0
    %79 = vmatprep.subr.mxu0 0.0
    %80 = vmatpush1.msra.mxu0 0.0
    %81 = vmatprep.subr.mxu0 0.0
    %82 = vmatpush1.msra.mxu0 0.0
    %83 = vmatprep.subr.mxu0 0.0
    %84 = vmatpush1.msra.mxu0 0.0
    %85 = vmatprep.subr.mxu0 0.0
    %86 = vmatpush1.msra.mxu0 0.0
    %87 = vmatprep.subr.mxu0 0.0
    %88 = vmatpush1.msra.mxu0 0.0
    %89 = vmatprep.subr.mxu0 0.0
    %90 = vmatpush1.msra.mxu0 0.0
    %91 = vmatprep.subr.mxu0 0.0
    %92 = vmatpush1.msra.mxu0 0.0
    %93 = vmatprep.subr.mxu0 0.0
    %94 = vmatpush1.msra.mxu0 0.0
    %95 = vmatprep.subr.mxu0 0.0
    %96 = vmatpush1.msra.mxu0 0.0
    %97 = vmatprep.subr.mxu0 0.0
    %98 = vmatpush1.msra.mxu0 0.0
    %99 = vmatprep.subr.mxu0 0.0
    %100 = vmatpush1.msra.mxu0 0.0
    %101 = vmatprep.subr.mxu0 0.0
    %102 = vmatpush1.msra.mxu0 0.0
    %103 = vmatprep.subr.mxu0 0.0
    %104 = vmatpush1.msra.mxu0 0.0
    %105 = vmatprep.subr.mxu0 0.0
    %106 = vmatpush1.msra.mxu0 0.0
    %107 = vmatprep.subr.mxu0 0.0
    %108 = vmatpush1.msra.mxu0 0.0
    %109 = vmatprep.subr.mxu0 0.0
    %110 = vmatpush1.msra.mxu0 0.0
    %111 = vmatprep.subr.mxu0 0.0
    %112 = vmatpush1.msra.mxu0 0.0
    %113 = vmatprep.subr.mxu0 0.0
    %114 = vmatpush1.msra.mxu0 0.0
    %115 = vmatprep.subr.mxu0 0.0
    %116 = vmatpush1.msra.mxu0 0.0
    %117 = vmatprep.subr.mxu0 0.0
    %118 = vmatpush1.msra.mxu0 0.0
    %119 = vmatprep.subr.mxu0 0.0
    %120 = vmatpush1.msra.mxu0 0.0
    %121 = vmatprep.subr.mxu0 0.0
    %122 = vmatpush1.msra.mxu0 0.0
    %123 = vmatprep.subr.mxu0 0.0
    %124 = vmatpush1.msra.mxu0 0.0
    %125 = vmatprep.subr.mxu0 0.0
    %126 = vmatpush1.msra.mxu0 0.0
    %127 = vmatprep.subr.mxu0 0.0
    %128 = vmatpush1.msra.mxu0 0.0
    %129 = vmatprep.mubr.f32.mxu0 0.0
    %130 = vmatmul.mubr.f32.gmra.mrb[0].mxu0 %v60
    %v131 = vpop.f32.mrb[0].mxu0
    %v132 = vadd.f32 0.0, %v131
    %v133 = vpop.f32.mrb[0].mxu0
    %134 = vmatprep.mubr.f32.mxu0 0.0
    %135 = vmatmul.mubr.f32.gmra.mrb[0].mxu0 %v63
    %v136 = vpop.f32.mrb[0].mxu0
    %v137 = vadd.f32 0.0, %v136
    %v138 = vpop.f32.mrb[0].mxu0
    %139 = vdwg.mxu0
    %v140 = vld [vmem:[%s2] sm:$0xff]
    %v141 = vld [vmem:[%s2 + $0x8] sm:$0xff]
    %v142 = vld [vmem:[%s3] sm:$0xff]
    %v143 = vld [vmem:[%s3 + $0x8] sm:$0xff]
    %v144 = vld [vmem:[%s3 + $0x10] sm:$0xff]
    %v145 = vld [vmem:[%s3 + $0x18] sm:$0xff]
    %v146 = vld [vmem:[%s3 + $0x20] sm:$0xff]
    %v147 = vld [vmem:[%s3 + $0x28] sm:$0xff]
    %v148 = vld [vmem:[%s3 + $0x30] sm:$0xff]
    %v149 = vld [vmem:[%s3 + $0x38] sm:$0xff]
    %v150 = vld [vmem:[%s3 + $0x40] sm:$0xff]
    %v151 = vld [vmem:[%s3 + $0x48] sm:$0xff]
    %v152 = vld [vmem:[%s3 + $0x50] sm:$0xff]
    %v153 = vld [vmem:[%s3 + $0x58] sm:$0xff]
    %v154 = vld [vmem:[%s3 + $0x60] sm:$0xff]
    %v155 = vld [vmem:[%s3 + $0x68] sm:$0xff]
    %v156 = vld [vmem:[%s3 + $0x70] sm:$0xff]
    %v157 = vld [vmem:[%s3 + $0x78] sm:$0xff]
    %v158 = vld [vmem:[%s4] sm:$0x3]
    %v159 = vld [vmem:[%s5] sm:$0xff]
    %v160 = vld [vmem:[%s6] sm:$0xff]
    %v161 = vld [vmem:[%s6 + $0x8] sm:$0xff]
    %v162 = vmul.f32 %v140, 64.0
    %v163 = vmul.f32 %v141, 64.0
    %165 = vset.pattern.permute.xlu0 0
    %166 = vperm.xlu0 %165, %v162
    %v167 = vpop.permute.xlu0 %166
    %170 = vset.pattern.permute.xlu0 0
    %171 = vperm.xlu0 %170, %v163
    %v172 = vpop.permute.xlu0 %171
    %174 = vmatprep.subr.mxu0 0.0
    %175 = vmatpush1.msra.mxu0 %v142
    %176 = vmatprep.subr.mxu0 0.0
    %177 = vmatpush1.msra.mxu0 %v143
    %178 = vmatprep.subr.mxu0 0.0
    %179 = vmatpush1.msra.mxu0 %v144
    %180 = vmatprep.subr.mxu0 0.0
    %181 = vmatpush1.msra.mxu0 %v145
    %182 = vmatprep.subr.mxu0 0.0
    %183 = vmatpush1.msra.mxu0 %v146
    %184 = vmatprep.subr.mxu0 0.0
    %185 = vmatpush1.msra.mxu0 %v147
    %186 = vmatprep.subr.mxu0 0.0
    %187 = vmatpush1.msra.mxu0 %v148
    %188 = vmatprep.subr.mxu0 0.0
    %189 = vmatpush1.msra.mxu0 %v149
    %190 = vmatprep.subr.mxu0 0.0
    %191 = vmatpush1.msra.mxu0 %v150
    %192 = vmatprep.subr.mxu0 0.0
    %193 = vmatpush1.msra.mxu0 %v151
    %194 = vmatprep.subr.mxu0 0.0
    %195 = vmatpush1.msra.mxu0 %v152
    %196 = vmatprep.subr.mxu0 0.0
    %197 = vmatpush1.msra.mxu0 %v153
    %198 = vmatprep.subr.mxu0 0.0
    %199 = vmatpush1.msra.mxu0 %v154
    %200 = vmatprep.subr.mxu0 0.0
    %201 = vmatpush1.msra.mxu0 %v155
    %202 = vmatprep.subr.mxu0 0.0
    %203 = vmatpush1.msra.mxu0 %v156
    %204 = vmatprep.subr.mxu0 0.0
    %205 = vmatpush1.msra.mxu0 %v157
    %206 = vmatprep.subr.mxu0 0.0
    %207 = vmatpush1.msra.mxu0 0.0
    %208 = vmatprep.subr.mxu0 0.0
    %209 = vmatpush1.msra.mxu0 0.0
    %210 = vmatprep.subr.mxu0 0.0
    %211 = vmatpush1.msra.mxu0 0.0
    %212 = vmatprep.subr.mxu0 0.0
    %213 = vmatpush1.msra.mxu0 0.0
    %214 = vmatprep.subr.mxu0 0.0
    %215 = vmatpush1.msra.mxu0 0.0
    %216 = vmatprep.subr.mxu0 0.0
    %217 = vmatpush1.msra.mxu0 0.0
    %218 = vmatprep.subr.mxu0 0.0
    %219 = vmatpush1.msra.mxu0 0.0
    %220 = vmatprep.subr.mxu0 0.0
    %221 = vmatpush1.msra.mxu0 0.0
    %222 = vmatprep.subr.mxu0 0.0
    %223 = vmatpush1.msra.mxu0 0.0
    %224 = vmatprep.subr.mxu0 0.0
    %225 = vmatpush1.msra.mxu0 0.0
    %226 = vmatprep.subr.mxu0 0.0
    %227 = vmatpush1.msra.mxu0 0.0
    %228 = vmatprep.subr.mxu0 0.0
    %229 = vmatpush1.msra.mxu0 0.0
    %230 = vmatprep.subr.mxu0 0.0
    %231 = vmatpush1.msra.mxu0 0.0
    %232 = vmatprep.subr.mxu0 0.0
    %233 = vmatpush1.msra.mxu0 0.0
    %234 = vmatprep.subr.mxu0 0.0
    %235 = vmatpush1.msra.mxu0 0.0
    %236 = vmatprep.subr.mxu0 0.0
    %237 = vmatpush1.msra.mxu0 0.0
    %238 = vmatprep.mubr.f32.mxu0 0.0
    %239 = vmatmul.mubr.f32.gmra.mrb[0].mxu0 %v132
    %v240 = vpop.f32.mrb[0].mxu0
    %v241 = vadd.f32 %v167, %v240
    %v242 = vpop.f32.mrb[0].mxu0
    %243 = vmatprep.mubr.f32.mxu0 0.0
    %244 = vmatmul.mubr.f32.gmra.mrb[0].mxu0 %v137
    %v245 = vpop.f32.mrb[0].mxu0
    %v246 = vadd.f32 %v172, %v245
    %v247 = vpop.f32.mrb[0].mxu0
    %248 = vdwg.mxu0
    %vm249 = vcmask 130048
    %v251 = vsel %vm249, %v159, 0
    %253 = vmatprep.subr.mxu0 0.0
    %254 = vmatpush1.msra.mxu0 %v241
    %255 = vmatprep.subr.mxu0 0.0
    %256 = vmatpush1.msra.mxu0 %v246
    %257 = vmatprep.subr.mxu0 0.0
    %258 = vmatpush1.msra.mxu0 0.0
    %259 = vmatprep.subr.mxu0 0.0
    %260 = vmatpush1.msra.mxu0 0.0
    %261 = vmatprep.subr.mxu0 0.0
    %262 = vmatpush1.msra.mxu0 0.0
    %263 = vmatprep.subr.mxu0 0.0
    %264 = vmatpush1.msra.mxu0 0.0
    %265 = vmatprep.subr.mxu0 0.0
    %266 = vmatpush1.msra.mxu0 0.0
    %267 = vmatprep.subr.mxu0 0.0
    %268 = vmatpush1.msra.mxu0 0.0
    %269 = vmatprep.subr.mxu0 0.0
    %270 = vmatpush1.msra.mxu0 0.0
    %271 = vmatprep.subr.mxu0 0.0
    %272 = vmatpush1.msra.mxu0 0.0
    %273 = vmatprep.subr.mxu0 0.0
    %274 = vmatpush1.msra.mxu0 0.0
    %275 = vmatprep.subr.mxu0 0.0
    %276 = vmatpush1.msra.mxu0 0.0
    %277 = vmatprep.subr.mxu0 0.0
    %278 = vmatpush1.msra.mxu0 0.0
    %279 = vmatprep.subr.mxu0 0.0
    %280 = vmatpush1.msra.mxu0 0.0
    %281 = vmatprep.subr.mxu0 0.0
    %282 = vmatpush1.msra.mxu0 0.0
    %283 = vmatprep.subr.mxu0 0.0
    %284 = vmatpush1.msra.mxu0 0.0
    %285 = vmatprep.subr.mxu0 0.0
    %286 = vmatpush1.msra.mxu0 0.0
    %287 = vmatprep.subr.mxu0 0.0
    %288 = vmatpush1.msra.mxu0 0.0
    %289 = vmatprep.subr.mxu0 0.0
    %290 = vmatpush1.msra.mxu0 0.0
    %291 = vmatprep.subr.mxu0 0.0
    %292 = vmatpush1.msra.mxu0 0.0
    %293 = vmatprep.subr.mxu0 0.0
    %294 = vmatpush1.msra.mxu0 0.0
    %295 = vmatprep.subr.mxu0 0.0
    %296 = vmatpush1.msra.mxu0 0.0
    %297 = vmatprep.subr.mxu0 0.0
    %298 = vmatpush1.msra.mxu0 0.0
    %299 = vmatprep.subr.mxu0 0.0
    %300 = vmatpush1.msra.mxu0 0.0
    %301 = vmatprep.subr.mxu0 0.0
    %302 = vmatpush1.msra.mxu0 0.0
    %303 = vmatprep.subr.mxu0 0.0
    %304 = vmatpush1.msra.mxu0 0.0
    %305 = vmatprep.subr.mxu0 0.0
    %306 = vmatpush1.msra.mxu0 0.0
    %307 = vmatprep.subr.mxu0 0.0
    %308 = vmatpush1.msra.mxu0 0.0
    %309 = vmatprep.subr.mxu0 0.0
    %310 = vmatpush1.msra.mxu0 0.0
    %311 = vmatprep.subr.mxu0 0.0
    %312 = vmatpush1.msra.mxu0 0.0
    %313 = vmatprep.subr.mxu0 0.0
    %314 = vmatpush1.msra.mxu0 0.0
    %315 = vmatprep.subr.mxu0 0.0
    %316 = vmatpush1.msra.mxu0 0.0
    %317 = vmatprep.mubr.f32.mxu0 0.0
    %318 = vmatmul.mubr.f32.gmra.mrb[0].mxu0 %v251
    %v319 = vpop.f32.mrb[0].mxu0
    %v320 = vadd.f32 0.0, %v319
    %v321 = vpop.f32.mrb[0].mxu0
    %322 = vdwg.mxu0
    %v323 = vmul.f32 %v320, 0.0078125
    %vm324 = vcmask 64512
    %v326 = vsel %vm324, %v160, 0
    %v329 = vsel %vm324, %v161, 0
    %331 = vmatprep.subr.mxu0 0.0
    %332 = vmatpush1.msra.mxu0 %v323
    %333 = vmatprep.subr.mxu0 0.0
    %334 = vmatpush1.msra.mxu0 0.0
    %335 = vmatprep.subr.mxu0 0.0
    %336 = vmatpush1.msra.mxu0 0.0
    %337 = vmatprep.subr.mxu0 0.0
    %338 = vmatpush1.msra.mxu0 0.0
    %339 = vmatprep.subr.mxu0 0.0
    %340 = vmatpush1.msra.mxu0 0.0
    %341 = vmatprep.subr.mxu0 0.0
    %342 = vmatpush1.msra.mxu0 0.0
    %343 = vmatprep.subr.mxu0 0.0
    %344 = vmatpush1.msra.mxu0 0.0
    %345 = vmatprep.subr.mxu0 0.0
    %346 = vmatpush1.msra.mxu0 0.0
    %347 = vmatprep.subr.mxu0 0.0
    %348 = vmatpush1.msra.mxu0 0.0
    %349 = vmatprep.subr.mxu0 0.0
    %350 = vmatpush1.msra.mxu0 0.0
    %351 = vmatprep.subr.mxu0 0.0
    %352 = vmatpush1.msra.mxu0 0.0
    %353 = vmatprep.subr.mxu0 0.0
    %354 = vmatpush1.msra.mxu0 0.0
    %355 = vmatprep.subr.mxu0 0.0
    %356 = vmatpush1.msra.mxu0 0.0
    %357 = vmatprep.subr.mxu0 0.0
    %358 = vmatpush1.msra.mxu0 0.0
    %359 = vmatprep.subr.mxu0 0.0
    %360 = vmatpush1.msra.mxu0 0.0
    %361 = vmatprep.subr.mxu0 0.0
    %362 = vmatpush1.msra.mxu0 0.0
    %363 = vmatprep.subr.mxu0 0.0
    %364 = vmatpush1.msra.mxu0 0.0
    %365 = vmatprep.subr.mxu0 0.0
    %366 = vmatpush1.msra.mxu0 0.0
    %367 = vmatprep.subr.mxu0 0.0
    %368 = vmatpush1.msra.mxu0 0.0
    %369 = vmatprep.subr.mxu0 0.0
    %370 = vmatpush1.msra.mxu0 0.0
    %371 = vmatprep.subr.mxu0 0.0
    %372 = vmatpush1.msra.mxu0 0.0
    %373 = vmatprep.subr.mxu0 0.0
    %374 = vmatpush1.msra.mxu0 0.0
    %375 = vmatprep.subr.mxu0 0.0
    %376 = vmatpush1.msra.mxu0 0.0
    %377 = vmatprep.subr.mxu0 0.0
    %378 = vmatpush1.msra.mxu0 0.0
    %379 = vmatprep.subr.mxu0 0.0
    %380 = vmatpush1.msra.mxu0 0.0
    %381 = vmatprep.subr.mxu0 0.0
    %382 = vmatpush1.msra.mxu0 0.0
    %383 = vmatprep.subr.mxu0 0.0
    %384 = vmatpush1.msra.mxu0 0.0
    %385 = vmatprep.subr.mxu0 0.0
    %386 = vmatpush1.msra.mxu0 0.0
    %387 = vmatprep.subr.mxu0 0.0
    %388 = vmatpush1.msra.mxu0 0.0
    %389 = vmatprep.subr.mxu0 0.0
    %390 = vmatpush1.msra.mxu0 0.0
    %391 = vmatprep.subr.mxu0 0.0
    %392 = vmatpush1.msra.mxu0 0.0
    %393 = vmatprep.subr.mxu0 0.0
    %394 = vmatpush1.msra.mxu0 0.0
    %395 = vmatprep.mubr.f32.mxu0 0.0
    %396 = vmatmul.mubr.f32.gmra.mrb[0].mxu0 %v326
    %v397 = vpop.f32.mrb[0].mxu0
    %v398 = vadd.f32 0.0, %v397
    %v399 = vpop.f32.mrb[0].mxu0
    %400 = vmatprep.mubr.f32.mxu0 0.0
    %401 = vmatmul.mubr.f32.gmra.mrb[0].mxu0 %v329
    %v402 = vpop.f32.mrb[0].mxu0
    %v403 = vadd.f32 0.0, %v402
    %v404 = vpop.f32.mrb[0].mxu0
    %405 = vdwg.mxu0
    %vm406 = vcmask 15360
    %v408 = vsel %vm406, %v398, 0
    %v411 = vsel %vm406, %v403, 0
    %vm413 = vcmask 1041408
    %v415 = vsel %vm413, %v158, 0
    %417 = vmatprep.subr.mxu0 0.0
    %418 = vmatpush1.msra.mxu0 %v415
    %419 = vmatprep.subr.mxu0 0.0
    %420 = vmatpush1.msra.mxu0 0.0
    %421 = vmatprep.subr.mxu0 0.0
    %422 = vmatpush1.msra.mxu0 0.0
    %423 = vmatprep.subr.mxu0 0.0
    %424 = vmatpush1.msra.mxu0 0.0
    %425 = vmatprep.subr.mxu0 0.0
    %426 = vmatpush1.msra.mxu0 0.0
    %427 = vmatprep.subr.mxu0 0.0
    %428 = vmatpush1.msra.mxu0 0.0
    %429 = vmatprep.subr.mxu0 0.0
    %430 = vmatpush1.msra.mxu0 0.0
    %431 = vmatprep.subr.mxu0 0.0
    %432 = vmatpush1.msra.mxu0 0.0
    %433 = vmatprep.subr.mxu0 0.0
    %434 = vmatpush1.msra.mxu0 0.0
    %435 = vmatprep.subr.mxu0 0.0
    %436 = vmatpush1.msra.mxu0 0.0
    %437 = vmatprep.subr.mxu0 0.0
    %438 = vmatpush1.msra.mxu0 0.0
    %439 = vmatprep.subr.mxu0 0.0
    %440 = vmatpush1.msra.mxu0 0.0
    %441 = vmatprep.subr.mxu0 0.0
    %442 = vmatpush1.msra.mxu0 0.0
    %443 = vmatprep.subr.mxu0 0.0
    %444 = vmatpush1.msra.mxu0 0.0
    %445 = vmatprep.subr.mxu0 0.0
    %446 = vmatpush1.msra.mxu0 0.0
    %447 = vmatprep.subr.mxu0 0.0
    %448 = vmatpush1.msra.mxu0 0.0
    %449 = vmatprep.subr.mxu0 0.0
    %450 = vmatpush1.msra.mxu0 0.0
    %451 = vmatprep.subr.mxu0 0.0
    %452 = vmatpush1.msra.mxu0 0.0
    %453 = vmatprep.subr.mxu0 0.0
    %454 = vmatpush1.msra.mxu0 0.0
    %455 = vmatprep.subr.mxu0 0.0
    %456 = vmatpush1.msra.mxu0 0.0
    %457 = vmatprep.subr.mxu0 0.0
    %458 = vmatpush1.msra.mxu0 0.0
    %459 = vmatprep.subr.mxu0 0.0
    %460 = vmatpush1.msra.mxu0 0.0
    %461 = vmatprep.subr.mxu0 0.0
    %462 = vmatpush1.msra.mxu0 0.0
    %463 = vmatprep.subr.mxu0 0.0
    %464 = vmatpush1.msra.mxu0 0.0
    %465 = vmatprep.subr.mxu0 0.0
    %466 = vmatpush1.msra.mxu0 0.0
    %467 = vmatprep.subr.mxu0 0.0
    %468 = vmatpush1.msra.mxu0 0.0
    %469 = vmatprep.subr.mxu0 0.0
    %470 = vmatpush1.msra.mxu0 0.0
    %471 = vmatprep.subr.mxu0 0.0
    %472 = vmatpush1.msra.mxu0 0.0
    %473 = vmatprep.subr.mxu0 0.0
    %474 = vmatpush1.msra.mxu0 0.0
    %475 = vmatprep.subr.mxu0 0.0
    %476 = vmatpush1.msra.mxu0 0.0
    %477 = vmatprep.subr.mxu0 0.0
    %478 = vmatpush1.msra.mxu0 0.0
    %479 = vmatprep.subr.mxu0 0.0
    %480 = vmatpush1.msra.mxu0 0.0
    %481 = vmatprep.mubr.f32.mxu0 0.0
    %482 = vmatmul.mubr.f32.gmra.mrb[0].mxu0 %v408
    %v483 = vpop.f32.mrb[0].mxu0
    %v484 = vadd.f32 0.0, %v483
    %v485 = vpop.f32.mrb[0].mxu0
    %486 = vmatprep.mubr.f32.mxu0 0.0
    %487 = vmatmul.mubr.f32.gmra.mrb[0].mxu0 %v411
    %v488 = vpop.f32.mrb[0].mxu0
    %v489 = vadd.f32 0.0, %v488
    %v490 = vpop.f32.mrb[0].mxu0
    %491 = vdwg.mxu0
    %493 = vset.pattern.permute.xlu0 0
    %494 = vperm.xlu0 %493, %v140
    %v495 = vpop.permute.xlu0 %494
    %498 = vset.pattern.permute.xlu0 0
    %499 = vperm.xlu0 %498, %v141
    %v500 = vpop.permute.xlu0 %499
    %v502 = vsub.f32 %v495, %v484
    %v503 = vsub.f32 %v500, %v489
    %v504 = vadd.f32 %v132, %v502
    %v505 = vadd.f32 %v137, %v503
    %v506 = vmul.f32 %v504, %v504
    %v507 = vmul.f32 %v505, %v505
    %508 = vmatprep.subr.mxu0 0.0
    %509 = vmatpush1.msra.mxu0 %v142
    %510 = vmatprep.subr.mxu0 0.0
    %511 = vmatpush1.msra.mxu0 %v143
    %512 = vmatprep.subr.mxu0 0.0
    %513 = vmatpush1.msra.mxu0 %v144
    %514 = vmatprep.subr.mxu0 0.0
    %515 = vmatpush1.msra.mxu0 %v145
    %516 = vmatprep.subr.mxu0 0.0
    %517 = vmatpush1.msra.mxu0 %v146
    %518 = vmatprep.subr.mxu0 0.0
    %519 = vmatpush1.msra.mxu0 %v147
    %520 = vmatprep.subr.mxu0 0.0
    %521 = vmatpush1.msra.mxu0 %v148
    %522 = vmatprep.subr.mxu0 0.0
    %523 = vmatpush1.msra.mxu0 %v149
    %524 = vmatprep.subr.mxu0 0.0
    %525 = vmatpush1.msra.mxu0 %v150
    %526 = vmatprep.subr.mxu0 0.0
    %527 = vmatpush1.msra.mxu0 %v151
    %528 = vmatprep.subr.mxu0 0.0
    %529 = vmatpush1.msra.mxu0 %v152
    %530 = vmatprep.subr.mxu0 0.0
    %531 = vmatpush1.msra.mxu0 %v153
    %532 = vmatprep.subr.mxu0 0.0
    %533 = vmatpush1.msra.mxu0 %v154
    %534 = vmatprep.subr.mxu0 0.0
    %535 = vmatpush1.msra.mxu0 %v155
    %536 = vmatprep.subr.mxu0 0.0
    %537 = vmatpush1.msra.mxu0 %v156
    %538 = vmatprep.subr.mxu0 0.0
    %539 = vmatpush1.msra.mxu0 %v157
    %540 = vmatprep.subr.mxu0 0.0
    %541 = vmatpush1.msra.mxu0 0.0
    %542 = vmatprep.subr.mxu0 0.0
    %543 = vmatpush1.msra.mxu0 0.0
    %544 = vmatprep.subr.mxu0 0.0
    %545 = vmatpush1.msra.mxu0 0.0
    %546 = vmatprep.subr.mxu0 0.0
    %547 = vmatpush1.msra.mxu0 0.0
    %548 = vmatprep.subr.mxu0 0.0
    %549 = vmatpush1.msra.mxu0 0.0
    %550 = vmatprep.subr.mxu0 0.0
    %551 = vmatpush1.msra.mxu0 0.0
    %552 = vmatprep.subr.mxu0 0.0
    %553 = vmatpush1.msra.mxu0 0.0
    %554 = vmatprep.subr.mxu0 0.0
    %555 = vmatpush1.msra.mxu0 0.0
    %556 = vmatprep.subr.mxu0 0.0
    %557 = vmatpush1.msra.mxu0 0.0
    %558 = vmatprep.subr.mxu0 0.0
    %559 = vmatpush1.msra.mxu0 0.0
    %560 = vmatprep.subr.mxu0 0.0
    %561 = vmatpush1.msra.mxu0 0.0
    %562 = vmatprep.subr.mxu0 0.0
    %563 = vmatpush1.msra.mxu0 0.0
    %564 = vmatprep.subr.mxu0 0.0
    %565 = vmatpush1.msra.mxu0 0.0
    %566 = vmatprep.subr.mxu0 0.0
    %567 = vmatpush1.msra.mxu0 0.0
    %568 = vmatprep.subr.mxu0 0.0
    %569 = vmatpush1.msra.mxu0 0.0
    %570 = vmatprep.subr.mxu0 0.0
    %571 = vmatpush1.msra.mxu0 0.0
    %572 = vmatprep.mubr.f32.mxu0 0.0
    %573 = vmatmul.mubr.f32.gmra.mrb[0].mxu0 %v506
    %v574 = vpop.f32.mrb[0].mxu0
    %v575 = vadd.f32 0.0, %v574
    %v576 = vpop.f32.mrb[0].mxu0
    %577 = vmatprep.mubr.f32.mxu0 0.0
    %578 = vmatmul.mubr.f32.gmra.mrb[0].mxu0 %v507
    %v579 = vpop.f32.mrb[0].mxu0
    %v580 = vadd.f32 0.0, %v579
    %v581 = vpop.f32.mrb[0].mxu0
    %582 = vdwg.mxu0
    %583 = vmatprep.subr.mxu0 0.0
    %584 = vmatpush1.msra.mxu0 %v575
    %585 = vmatprep.subr.mxu0 0.0
    %586 = vmatpush1.msra.mxu0 %v580
    %587 = vmatprep.subr.mxu0 0.0
    %588 = vmatpush1.msra.mxu0 0.0
    %589 = vmatprep.subr.mxu0 0.0
    %590 = vmatpush1.msra.mxu0 0.0
    %591 = vmatprep.subr.mxu0 0.0
    %592 = vmatpush1.msra.mxu0 0.0
    %593 = vmatprep.subr.mxu0 0.0
    %594 = vmatpush1.msra.mxu0 0.0
    %595 = vmatprep.subr.mxu0 0.0
    %596 = vmatpush1.msra.mxu0 0.0
    %597 = vmatprep.subr.mxu0 0.0
    %598 = vmatpush1.msra.mxu0 0.0
    %599 = vmatprep.subr.mxu0 0.0
    %600 = vmatpush1.msra.mxu0 0.0
    %601 = vmatprep.subr.mxu0 0.0
    %602 = vmatpush1.msra.mxu0 0.0
    %603 = vmatprep.subr.mxu0 0.0
    %604 = vmatpush1.msra.mxu0 0.0
    %605 = vmatprep.subr.mxu0 0.0
    %606 = vmatpush1.msra.mxu0 0.0
    %607 = vmatprep.subr.mxu0 0.0
    %608 = vmatpush1.msra.mxu0 0.0
    %609 = vmatprep.subr.mxu0 0.0
    %610 = vmatpush1.msra.mxu0 0.0
    %611 = vmatprep.subr.mxu0 0.0
    %612 = vmatpush1.msra.mxu0 0.0
    %613 = vmatprep.subr.mxu0 0.0
    %614 = vmatpush1.msra.mxu0 0.0
    %615 = vmatprep.subr.mxu0 0.0
    %616 = vmatpush1.msra.mxu0 0.0
    %617 = vmatprep.subr.mxu0 0.0
    %618 = vmatpush1.msra.mxu0 0.0
    %619 = vmatprep.subr.mxu0 0.0
    %620 = vmatpush1.msra.mxu0 0.0
    %621 = vmatprep.subr.mxu0 0.0
    %622 = vmatpush1.msra.mxu0 0.0
    %623 = vmatprep.subr.mxu0 0.0
    %624 = vmatpush1.msra.mxu0 0.0
    %625 = vmatprep.subr.mxu0 0.0
    %626 = vmatpush1.msra.mxu0 0.0
    %627 = vmatprep.subr.mxu0 0.0
    %628 = vmatpush1.msra.mxu0 0.0
    %629 = vmatprep.subr.mxu0 0.0
    %630 = vmatpush1.msra.mxu0 0.0
    %631 = vmatprep.subr.mxu0 0.0
    %632 = vmatpush1.msra.mxu0 0.0
    %633 = vmatprep.subr.mxu0 0.0
    %634 = vmatpush1.msra.mxu0 0.0
    %635 = vmatprep.subr.mxu0 0.0
    %636 = vmatpush1.msra.mxu0 0.0
    %637 = vmatprep.subr.mxu0 0.0
    %638 = vmatpush1.msra.mxu0 0.0
    %639 = vmatprep.subr.mxu0 0.0
    %640 = vmatpush1.msra.mxu0 0.0
    %641 = vmatprep.subr.mxu0 0.0
    %642 = vmatpush1.msra.mxu0 0.0
    %643 = vmatprep.subr.mxu0 0.0
    %644 = vmatpush1.msra.mxu0 0.0
    %645 = vmatprep.subr.mxu0 0.0
    %646 = vmatpush1.msra.mxu0 0.0
    %647 = vmatprep.mubr.f32.mxu0 0.0
    %648 = vmatmul.mubr.f32.gmra.mrb[0].mxu0 %v251
    %v649 = vpop.f32.mrb[0].mxu0
    %v650 = vadd.f32 0.0, %v649
    %v651 = vpop.f32.mrb[0].mxu0
    %652 = vdwg.mxu0
    %v653 = vmul.f32 %v650, 0.0078125
    %v654 = vadd.f32 %v653, 1e-05
    %v655 = vrsqrt.pop %v654
    %656 = vmatprep.subr.mxu0 0.0
    %657 = vmatpush1.msra.mxu0 %v655
    %658 = vmatprep.subr.mxu0 0.0
    %659 = vmatpush1.msra.mxu0 0.0
    %660 = vmatprep.subr.mxu0 0.0
    %661 = vmatpush1.msra.mxu0 0.0
    %662 = vmatprep.subr.mxu0 0.0
    %663 = vmatpush1.msra.mxu0 0.0
    %664 = vmatprep.subr.mxu0 0.0
    %665 = vmatpush1.msra.mxu0 0.0
    %666 = vmatprep.subr.mxu0 0.0
    %667 = vmatpush1.msra.mxu0 0.0
    %668 = vmatprep.subr.mxu0 0.0
    %669 = vmatpush1.msra.mxu0 0.0
    %670 = vmatprep.subr.mxu0 0.0
    %671 = vmatpush1.msra.mxu0 0.0
    %672 = vmatprep.subr.mxu0 0.0
    %673 = vmatpush1.msra.mxu0 0.0
    %674 = vmatprep.subr.mxu0 0.0
    %675 = vmatpush1.msra.mxu0 0.0
    %676 = vmatprep.subr.mxu0 0.0
    %677 = vmatpush1.msra.mxu0 0.0
    %678 = vmatprep.subr.mxu0 0.0
    %679 = vmatpush1.msra.mxu0 0.0
    %680 = vmatprep.subr.mxu0 0.0
    %681 = vmatpush1.msra.mxu0 0.0
    %682 = vmatprep.subr.mxu0 0.0
    %683 = vmatpush1.msra.mxu0 0.0
    %684 = vmatprep.subr.mxu0 0.0
    %685 = vmatpush1.msra.mxu0 0.0
    %686 = vmatprep.subr.mxu0 0.0
    %687 = vmatpush1.msra.mxu0 0.0
    %688 = vmatprep.subr.mxu0 0.0
    %689 = vmatpush1.msra.mxu0 0.0
    %690 = vmatprep.subr.mxu0 0.0
    %691 = vmatpush1.msra.mxu0 0.0
    %692 = vmatprep.subr.mxu0 0.0
    %693 = vmatpush1.msra.mxu0 0.0
    %694 = vmatprep.subr.mxu0 0.0
    %695 = vmatpush1.msra.mxu0 0.0
    %696 = vmatprep.subr.mxu0 0.0
    %697 = vmatpush1.msra.mxu0 0.0
    %698 = vmatprep.subr.mxu0 0.0
    %699 = vmatpush1.msra.mxu0 0.0
    %700 = vmatprep.subr.mxu0 0.0
    %701 = vmatpush1.msra.mxu0 0.0
    %702 = vmatprep.subr.mxu0 0.0
    %703 = vmatpush1.msra.mxu0 0.0
    %704 = vmatprep.subr.mxu0 0.0
    %705 = vmatpush1.msra.mxu0 0.0
    %706 = vmatprep.subr.mxu0 0.0
    %707 = vmatpush1.msra.mxu0 0.0
    %708 = vmatprep.subr.mxu0 0.0
    %709 = vmatpush1.msra.mxu0 0.0
    %710 = vmatprep.subr.mxu0 0.0
    %711 = vmatpush1.msra.mxu0 0.0
    %712 = vmatprep.subr.mxu0 0.0
    %713 = vmatpush1.msra.mxu0 0.0
    %714 = vmatprep.subr.mxu0 0.0
    %715 = vmatpush1.msra.mxu0 0.0
    %716 = vmatprep.subr.mxu0 0.0
    %717 = vmatpush1.msra.mxu0 0.0
    %718 = vmatprep.subr.mxu0 0.0
    %719 = vmatpush1.msra.mxu0 0.0
    %720 = vmatprep.mubr.f32.mxu0 0.0
    %721 = vmatmul.mubr.f32.gmra.mrb[0].mxu0 %v326
    %v722 = vpop.f32.mrb[0].mxu0
    %v723 = vadd.f32 0.0, %v722
    %v724 = vpop.f32.mrb[0].mxu0
    %725 = vmatprep.mubr.f32.mxu0 0.0
    %726 = vmatmul.mubr.f32.gmra.mrb[0].mxu0 %v329
    %v727 = vpop.f32.mrb[0].mxu0
    %v728 = vadd.f32 0.0, %v727
    %v729 = vpop.f32.mrb[0].mxu0
    %730 = vdwg.mxu0
    %731 = vset.pattern.permute.xlu0 1
    %732 = vperm.xlu0 %731, %v140
    %v733 = vpop.permute.xlu0 %732
    %735 = vset.pattern.permute.xlu0 1
    %736 = vperm.xlu0 %735, %v141
    %v737 = vpop.permute.xlu0 %736
    %v739 = vmul.f32 %v723, %v733
    %v740 = vmul.f32 %v728, %v737
    %v742 = vsel %vm406, %v739, 0
    %v745 = vsel %vm406, %v740, 0
    %747 = vmatprep.subr.mxu0 0.0
    %748 = vmatpush1.msra.mxu0 %v415
    %749 = vmatprep.subr.mxu0 0.0
    %750 = vmatpush1.msra.mxu0 0.0
    %751 = vmatprep.subr.mxu0 0.0
    %752 = vmatpush1.msra.mxu0 0.0
    %753 = vmatprep.subr.mxu0 0.0
    %754 = vmatpush1.msra.mxu0 0.0
    %755 = vmatprep.subr.mxu0 0.0
    %756 = vmatpush1.msra.mxu0 0.0
    %757 = vmatprep.subr.mxu0 0.0
    %758 = vmatpush1.msra.mxu0 0.0
    %759 = vmatprep.subr.mxu0 0.0
    %760 = vmatpush1.msra.mxu0 0.0
    %761 = vmatprep.subr.mxu0 0.0
    %762 = vmatpush1.msra.mxu0 0.0
    %763 = vmatprep.subr.mxu0 0.0
    %764 = vmatpush1.msra.mxu0 0.0
    %765 = vmatprep.subr.mxu0 0.0
    %766 = vmatpush1.msra.mxu0 0.0
    %767 = vmatprep.subr.mxu0 0.0
    %768 = vmatpush1.msra.mxu0 0.0
    %769 = vmatprep.subr.mxu0 0.0
    %770 = vmatpush1.msra.mxu0 0.0
    %771 = vmatprep.subr.mxu0 0.0
    %772 = vmatpush1.msra.mxu0 0.0
    %773 = vmatprep.subr.mxu0 0.0
    %774 = vmatpush1.msra.mxu0 0.0
    %775 = vmatprep.subr.mxu0 0.0
    %776 = vmatpush1.msra.mxu0 0.0
    %777 = vmatprep.subr.mxu0 0.0
    %778 = vmatpush1.msra.mxu0 0.0
    %779 = vmatprep.subr.mxu0 0.0
    %780 = vmatpush1.msra.mxu0 0.0
    %781 = vmatprep.subr.mxu0 0.0
    %782 = vmatpush1.msra.mxu0 0.0
    %783 = vmatprep.subr.mxu0 0.0
    %784 = vmatpush1.msra.mxu0 0.0
    %785 = vmatprep.subr.mxu0 0.0
    %786 = vmatpush1.msra.mxu0 0.0
    %787 = vmatprep.subr.mxu0 0.0
    %788 = vmatpush1.msra.mxu0 0.0
    %789 = vmatprep.subr.mxu0 0.0
    %790 = vmatpush1.msra.mxu0 0.0
    %791 = vmatprep.subr.mxu0 0.0
    %792 = vmatpush1.msra.mxu0 0.0
    %793 = vmatprep.subr.mxu0 0.0
    %794 = vmatpush1.msra.mxu0 0.0
    %795 = vmatprep.subr.mxu0 0.0
    %796 = vmatpush1.msra.mxu0 0.0
    %797 = vmatprep.subr.mxu0 0.0
    %798 = vmatpush1.msra.mxu0 0.0
    %799 = vmatprep.subr.mxu0 0.0
    %800 = vmatpush1.msra.mxu0 0.0
    %801 = vmatprep.subr.mxu0 0.0
    %802 = vmatpush1.msra.mxu0 0.0
    %803 = vmatprep.subr.mxu0 0.0
    %804 = vmatpush1.msra.mxu0 0.0
    %805 = vmatprep.subr.mxu0 0.0
    %806 = vmatpush1.msra.mxu0 0.0
    %807 = vmatprep.subr.mxu0 0.0
    %808 = vmatpush1.msra.mxu0 0.0
    %809 = vmatprep.subr.mxu0 0.0
    %810 = vmatpush1.msra.mxu0 0.0
    %811 = vmatprep.mubr.f32.mxu0 0.0
    %812 = vmatmul.mubr.f32.gmra.mrb[0].mxu0 %v742
    %v813 = vpop.f32.mrb[0].mxu0
    %v814 = vadd.f32 0.0, %v813
    %v815 = vpop.f32.mrb[0].mxu0
    %816 = vmatprep.mubr.f32.mxu0 0.0
    %817 = vmatmul.mubr.f32.gmra.mrb[0].mxu0 %v745
    %v818 = vpop.f32.mrb[0].mxu0
    %v819 = vadd.f32 0.0, %v818
    %v820 = vpop.f32.mrb[0].mxu0
    %821 = vdwg.mxu0
    %v822 = vmul.f32 %v504, %v814
    %v823 = vmul.f32 %v505, %v819
    %824 = vset.pattern.permute.xlu0 2
    %825 = vperm.xlu0 %824, %v140
    %v826 = vpop.permute.xlu0 %825
    %828 = vset.pattern.permute.xlu0 2
    %829 = vperm.xlu0 %828, %v141
    %v830 = vpop.permute.xlu0 %829
    %v832 = vadd.f32 %v822, %v826
    %v833 = vadd.f32 %v823, %v830
    %v834 = vmin.f32 %v832, 20.0
    %v835 = vmin.f32 %v833, 20.0
    %v836 = vmul.f32 %v834, 1.442695
    %v837 = vpow.pop %v836
    %v838 = vmul.f32 %v835, 1.442695
    %v839 = vpow.pop %v838
    %v840 = vadd.f32 %v837, 2.0
    %v841 = vadd.f32 %v839, 2.0
    %v842 = vmul.f32 %v837, %v840
    %v843 = vmul.f32 %v839, %v841
    %v844 = vadd.f32 %v842, 2.0
    %v845 = vadd.f32 %v843, 2.0
    %v846 = vrcp.pop %v844
    %v847 = vrcp.pop %v845
    %v848 = vmul.f32 %v842, %v846
    %v849 = vmul.f32 %v843, %v847
    %v850 = vmul.f32 %v832, %v848
    %v851 = vmul.f32 %v833, %v849
    %vm852 = vcmp.gt.f32.partialorder %v832, 20.0
    %vm853 = vcmp.gt.f32.partialorder %v833, 20.0
    %v854 = vsel %vm852, %v832, %v850
    %v855 = vsel %vm853, %v833, %v851
    %856 = vst [vmem:[#allocation3] sm:$0xff] %v854
    %857 = vst [vmem:[#allocation3 + $0x8] sm:$0xff] %v855
    // Predicated region
    $region30: #{tpu_custom_call.1} parent=1 // pred_check
      _
    $region31: #{tpu_custom_call.1} parent=1 // pred_check_branch
      %859 = sbr.rel (0) target = $region33
    $region32: #{tpu_custom_call.1} parent=1 // pred_region
      %s861 = ssub.s32 256, 256
      %862 = vsyncadd [#allocation4], %s861
      %s863 = sshll.u32 [#allocation3], 4
      %s864 = int_to_ptr.vmem [resolvable:$true] %s863
      %869 = dma.vmem_to_hbm [thread:$0]  %s864, 256, %s7, [#allocation4], 128, 128, 8
    $region33: #{tpu_custom_call.1} parent=1 // pred_fallthru
      _
    // Predicated region
    $region34: #{tpu_custom_call.1} parent=1 // pred_check
      _
    $region35: #{tpu_custom_call.1} parent=1 // pred_check_branch
      %871 = sbr.rel (0) target = $region37
    $region36: #{tpu_custom_call.1} parent=1 // pred_region
      %872 = dma.done [#allocation4], 256
    $region37: #{tpu_custom_call.1} parent=1 // pred_fallthru
      _
    %873 = vsyncpa [#allocation4], 1

</llo_original>
